<compile_context>
chip_gen: v7x
topology: tpu7x:2x2x1
jax: 0.10.0
libtpu: 0.0.40
codegen_flags: <defaults>
</compile_context>

<pallas_src>
import functools

import jax
import jax.numpy as jnp
from jax.experimental import pallas as pl
from jax.experimental.pallas import tpu as pltpu


# -----------------------------------------------------------------------------
# Kernel: fused 3-layer MLP with LeakyReLU(0.2) between layers.
# Hidden dims are zero-padded (once, in prepare_params) to 128 lanes so the MXU
# / lane layout is dense; padded lanes stay exactly zero through every stage
# (0-weight columns, 0 bias, leaky_relu(0) == 0) so they never leak into valid
# outputs.  Matmuls use bf16 operands with f32 accumulation; elementwise math
# is f32.  Only the valid output columns are stored.
# -----------------------------------------------------------------------------
def _disc_kernel(x_ref, w1_ref, b1_ref, w2_ref, b2_ref, w3_ref, b3_ref, o_ref):
    # f32 -> bf16 cast in-kernel (VPU has plenty of slack; halves x HBM bytes).
    x = x_ref[...].astype(w1_ref.dtype)                              # (TB, D) bf16

    h1 = jnp.dot(x, w1_ref[...], preferred_element_type=jnp.float32)
    h1 = h1 + b1_ref[...]                                            # (TB, Hp) f32
    h1 = jnp.where(h1 > 0, h1, 0.2 * h1)                             # LeakyReLU(0.2)
    # Dropout(0.2): identity in eval mode.

    h2 = jnp.dot(h1.astype(w2_ref.dtype), w2_ref[...],
                 preferred_element_type=jnp.float32)
    h2 = h2 + b2_ref[...]                                            # (TB, Hp) f32
    h2 = jnp.where(h2 > 0, h2, 0.2 * h2)
    # Dropout(0.2): identity in eval mode.

    out = jnp.dot(h2.astype(w3_ref.dtype), w3_ref[...],
                  preferred_element_type=jnp.float32)
    out = out + b3_ref[...]                                          # (TB, Op) f32
    # Store only the valid output columns (O = o_ref.shape[1]).
    o_ref[...] = out[:, : o_ref.shape[1]].astype(o_ref.dtype)


def _pad_to(x, target, axis):
    pad = target - x.shape[axis]
    if pad == 0:
        return x
    widths = [(0, 0)] * x.ndim
    widths[axis] = (0, pad)
    return jnp.pad(x, widths)


def _round_up(n, m):
    return ((n + m - 1) // m) * m


def _choose_tb(batch):
    """Batch tile size (static, derived from the traced shape)."""
    if batch <= 256:
        # Single grid step.  TB == batch is always a legal block (full-dim rule),
        # even when batch is not a multiple of 8.
        return batch
    # Keep >= 2 grid steps so the "parallel" batch axis can be split across
    # v7x's two TensorCores; cap at 512 rows (per-step overhead already
    # amortized, intermediates stay modest for the v5e store path).
    half = _round_up(-(-batch // 2), 8)
    return min(512, half)


def prepare_params(params, compute_dtype=jnp.bfloat16):
    """One-time packing: pad hidden/output dims to 128 lanes, cast weights to
    bf16 for the MXU.  Biases stay f32 (added after f32 accumulation).
    The input feature dim D is left unpadded."""
    w1, b1, w2, b2, w3, b3 = params
    H = w1.shape[1]
    O = w3.shape[1]
    Hp = _round_up(H, 128)
    Op = _round_up(O, 128)

    w1p = _pad_to(w1, Hp, 1).astype(compute_dtype)                    # (D,  Hp)
    b1p = _pad_to(b1.reshape(1, -1), Hp, 1).astype(jnp.float32)       # (1,  Hp)
    w2p = _pad_to(_pad_to(w2, Hp, 0), Hp, 1).astype(compute_dtype)    # (Hp, Hp)
    b2p = _pad_to(b2.reshape(1, -1), Hp, 1).astype(jnp.float32)       # (1,  Hp)
    w3p = _pad_to(_pad_to(w3, Hp, 0), Op, 1).astype(compute_dtype)    # (Hp, Op)
    b3p = _pad_to(b3.reshape(1, -1), Op, 1).astype(jnp.float32)       # (1,  Op)
    return (w1p, b1p, w2p, b2p, w3p, b3p)


@functools.partial(jax.jit, static_argnames=("output_dim",))
def discriminator_forward(x, packed_params, output_dim):
    """x: (B, input_dim) float32. Returns (B, output_dim) float32."""
    w1p, b1p, w2p, b2p, w3p, b3p = packed_params
    B, D = x.shape
    Hp = w1p.shape[1]
    Op = w3p.shape[1]
    O = output_dim

    TB = _choose_tb(B)
    grid = (pl.cdiv(B, TB),)   # ragged last block handled by Pallas (no batch pad)

    out = pl.pallas_call(
        _disc_kernel,
        out_shape=jax.ShapeDtypeStruct((B, O), jnp.float32),
        grid=grid,
        in_specs=[
            pl.BlockSpec((TB, D), lambda i: (i, 0)),    # x tile (f32; D = full dim)
            pl.BlockSpec((D, Hp), lambda i: (0, 0)),    # W1
            pl.BlockSpec((1, Hp), lambda i: (0, 0)),    # b1
            pl.BlockSpec((Hp, Hp), lambda i: (0, 0)),   # W2
            pl.BlockSpec((1, Hp), lambda i: (0, 0)),    # b2
            pl.BlockSpec((Hp, Op), lambda i: (0, 0)),   # W3
            pl.BlockSpec((1, Op), lambda i: (0, 0)),    # b3
        ],
        out_specs=pl.BlockSpec((TB, O), lambda i: (i, 0)),  # only valid columns
        compiler_params=pltpu.CompilerParams(
            dimension_semantics=("parallel",)),
    )(x, w1p, b1p, w2p, b2p, w3p, b3p)

    return out


def init_params(key, input_dim, hidden_dim, output_dim):
    """Deterministic init mirroring PyTorch nn.Linear default U(-1/sqrt(fan_in), +)."""
    ks = jax.random.split(key, 6)

    def linear(kw, kb, fan_in, fan_out):
        bound = 1.0 / jnp.sqrt(fan_in)
        # Stored as (in, out) so the kernel does x @ W (transposed vs torch (out, in)).
        w = jax.random.uniform(kw, (fan_in, fan_out), jnp.float32, -bound, bound)
        b = jax.random.uniform(kb, (fan_out,), jnp.float32, -bound, bound)
        return w, b

    w1, b1 = linear(ks[0], ks[1], input_dim, hidden_dim)
    w2, b2 = linear(ks[2], ks[3], hidden_dim, hidden_dim)
    w3, b3 = linear(ks[4], ks[5], hidden_dim, output_dim)
    return (w1, b1, w2, b2, w3, b3)


def _reference_forward(x, params):
    """Pure-JAX reference using the same bf16-operand / f32-accumulate scheme."""
    w1, b1, w2, b2, w3, b3 = params
    bf = jnp.bfloat16
    h = jnp.dot(x.astype(bf), w1.astype(bf), preferred_element_type=jnp.float32) + b1
    h = jnp.where(h > 0, h, 0.2 * h)
    h = jnp.dot(h.astype(bf), w2.astype(bf), preferred_element_type=jnp.float32) + b2
    h = jnp.where(h > 0, h, 0.2 * h)
    return jnp.dot(h.astype(bf), w3.astype(bf), preferred_element_type=jnp.float32) + b3


if __name__ == "__main__":
    input_dim = 32
    hidden_dim = 100
    output_dim = 8

    key = jax.random.PRNGKey(0)
    kp, kx_a, kx_b, kx_c = jax.random.split(key, 4)

    params = init_params(kp, input_dim, hidden_dim, output_dim)
    packed = prepare_params(params)   # pad + bf16-cast once, outside the hot path

    # Tiny batch (TB == B, single step), 8-row batch, and a large ragged batch
    # (2 grid steps, last block partially out of bounds).
    for batch, kx in ((2, kx_a), (8, kx_b), (300, kx_c)):
        x = jax.random.normal(kx, (batch, input_dim), dtype=jnp.float32)
        out = jax.block_until_ready(discriminator_forward(x, packed, output_dim))
        ref = _reference_forward(x, params)
        assert out.shape == (batch, output_dim), out.shape
        assert jnp.allclose(out, ref, atol=5e-3, rtol=5e-3), \
            float(jnp.max(jnp.abs(out - ref)))

    print("KERNEL_OK")
</pallas_src>

<mosaic_0001>
module attributes {stable_mosaic.version = 11 : i64} {
  func.func @_disc_kernel(%arg0: i32, %arg1: memref<2x32xf32, #tpu.memory_space<vmem>>, %arg2: memref<32x128xbf16, #tpu.memory_space<vmem>>, %arg3: memref<1x128xf32, #tpu.memory_space<vmem>>, %arg4: memref<128x128xbf16, #tpu.memory_space<vmem>>, %arg5: memref<1x128xf32, #tpu.memory_space<vmem>>, %arg6: memref<128x128xbf16, #tpu.memory_space<vmem>>, %arg7: memref<1x128xf32, #tpu.memory_space<vmem>>, %arg8: memref<2x8xf32, #tpu.memory_space<vmem>>) attributes {dimension_semantics = [#tpu.dimension_semantics<parallel>], iteration_bounds = array<i64: 1>, scalar_prefetch = 0 : i64, scratch_operands = 0 : i64, tpu.core_type = #tpu.core_type<tc>, window_params = [{transform_indices = @transform_0, window_bounds = array<i64: 2, 32>}, {pipeline_mode = #tpu.pipeline_mode<synchronous>, transform_indices = @transform_1, window_bounds = array<i64: 32, 128>}, {pipeline_mode = #tpu.pipeline_mode<synchronous>, transform_indices = @transform_2, window_bounds = array<i64: 1, 128>}, {pipeline_mode = #tpu.pipeline_mode<synchronous>, transform_indices = @transform_3, window_bounds = array<i64: 128, 128>}, {pipeline_mode = #tpu.pipeline_mode<synchronous>, transform_indices = @transform_4, window_bounds = array<i64: 1, 128>}, {pipeline_mode = #tpu.pipeline_mode<synchronous>, transform_indices = @transform_5, window_bounds = array<i64: 128, 128>}, {pipeline_mode = #tpu.pipeline_mode<synchronous>, transform_indices = @transform_6, window_bounds = array<i64: 1, 128>}, {transform_indices = @transform_7, window_bounds = array<i64: 2, 8>}]} {
    %c0 = arith.constant 0 : index
    %c0_0 = arith.constant 0 : index
    %0 = vector.load %arg1[%c0, %c0_0] : memref<2x32xf32, #tpu.memory_space<vmem>>, vector<2x32xf32>
    %1 = arith.truncf %0 : vector<2x32xf32> to vector<2x32xbf16>
    %c0_1 = arith.constant 0 : index
    %c0_2 = arith.constant 0 : index
    %2 = vector.load %arg2[%c0_1, %c0_2] : memref<32x128xbf16, #tpu.memory_space<vmem>>, vector<32x128xbf16>
    %cst = arith.constant dense<0.000000e+00> : vector<2x128xf32>
    %3 = tpu.matmul %1, %2, %cst {dimension_numbers = #tpu.dot_dimension_numbers<[1], [0], [0], [1], [0, 0, 1, 1], [], []>} : vector<2x32xbf16>, vector<32x128xbf16>, vector<2x128xf32> -> vector<2x128xf32>
    %c0_3 = arith.constant 0 : index
    %c0_4 = arith.constant 0 : index
    %4 = vector.load %arg3[%c0_3, %c0_4] : memref<1x128xf32, #tpu.memory_space<vmem>>, vector<1x128xf32>
    %5 = vector.broadcast %4 : vector<1x128xf32> to vector<2x128xf32>
    %6 = arith.addf %3, %5 : vector<2x128xf32>
    %cst_5 = arith.constant 0.000000e+00 : f32
    %7 = vector.broadcast %cst_5 : f32 to vector<2x128xf32>
    %8 = arith.cmpf ogt, %6, %7 : vector<2x128xf32>
    %cst_6 = arith.constant 2.000000e-01 : f32
    %9 = vector.broadcast %cst_6 : f32 to vector<2x128xf32>
    %10 = arith.mulf %9, %6 : vector<2x128xf32>
    %11 = arith.select %8, %6, %10 : vector<2x128xi1>, vector<2x128xf32>
    %12 = arith.truncf %11 : vector<2x128xf32> to vector<2x128xbf16>
    %c0_7 = arith.constant 0 : index
    %c0_8 = arith.constant 0 : index
    %13 = vector.load %arg4[%c0_7, %c0_8] : memref<128x128xbf16, #tpu.memory_space<vmem>>, vector<128x128xbf16>
    %cst_9 = arith.constant dense<0.000000e+00> : vector<2x128xf32>
    %14 = tpu.matmul %12, %13, %cst_9 {dimension_numbers = #tpu.dot_dimension_numbers<[1], [0], [0], [1], [0, 0, 1, 1], [], []>} : vector<2x128xbf16>, vector<128x128xbf16>, vector<2x128xf32> -> vector<2x128xf32>
    %c0_10 = arith.constant 0 : index
    %c0_11 = arith.constant 0 : index
    %15 = vector.load %arg5[%c0_10, %c0_11] : memref<1x128xf32, #tpu.memory_space<vmem>>, vector<1x128xf32>
    %16 = vector.broadcast %15 : vector<1x128xf32> to vector<2x128xf32>
    %17 = arith.addf %14, %16 : vector<2x128xf32>
    %cst_12 = arith.constant 0.000000e+00 : f32
    %18 = vector.broadcast %cst_12 : f32 to vector<2x128xf32>
    %19 = arith.cmpf ogt, %17, %18 : vector<2x128xf32>
    %cst_13 = arith.constant 2.000000e-01 : f32
    %20 = vector.broadcast %cst_13 : f32 to vector<2x128xf32>
    %21 = arith.mulf %20, %17 : vector<2x128xf32>
    %22 = arith.select %19, %17, %21 : vector<2x128xi1>, vector<2x128xf32>
    %23 = arith.truncf %22 : vector<2x128xf32> to vector<2x128xbf16>
    %c0_14 = arith.constant 0 : index
    %c0_15 = arith.constant 0 : index
    %24 = vector.load %arg6[%c0_14, %c0_15] : memref<128x128xbf16, #tpu.memory_space<vmem>>, vector<128x128xbf16>
    %cst_16 = arith.constant dense<0.000000e+00> : vector<2x128xf32>
    %25 = tpu.matmul %23, %24, %cst_16 {dimension_numbers = #tpu.dot_dimension_numbers<[1], [0], [0], [1], [0, 0, 1, 1], [], []>} : vector<2x128xbf16>, vector<128x128xbf16>, vector<2x128xf32> -> vector<2x128xf32>
    %c0_17 = arith.constant 0 : index
    %c0_18 = arith.constant 0 : index
    %26 = vector.load %arg7[%c0_17, %c0_18] : memref<1x128xf32, #tpu.memory_space<vmem>>, vector<1x128xf32>
    %27 = vector.broadcast %26 : vector<1x128xf32> to vector<2x128xf32>
    %28 = arith.addf %25, %27 : vector<2x128xf32>
    %29 = vector.extract_strided_slice %28 {offsets = [0, 0], sizes = [2, 8], strides = [1, 1]} : vector<2x128xf32> to vector<2x8xf32>
    %c0_19 = arith.constant 0 : index
    %c0_20 = arith.constant 0 : index
    %30 = vector.load %arg8[%c0_19, %c0_20] : memref<2x8xf32, #tpu.memory_space<vmem>>, vector<2x8xf32>
    tpu.vector_store %arg8[%c0_19, %c0_20], %29 {strides = array<i32>} : memref<2x8xf32, #tpu.memory_space<vmem>>, vector<2x8xf32>,
    return
  }
  func.func @transform_0(%arg0: i32) -> (i32, i32) {
    %c0_i32 = arith.constant 0 : i32
    %c0_i32_0 = arith.constant 0 : i32
    return %arg0, %c0_i32 : i32, i32
  }
  func.func @transform_1(%arg0: i32) -> (i32, i32) {
    %c0_i32 = arith.constant 0 : i32
    %c0_i32_0 = arith.constant 0 : i32
    %c0_i32_1 = arith.constant 0 : i32
    return %c0_i32, %c0_i32_0 : i32, i32
  }
  func.func @transform_2(%arg0: i32) -> (i32, i32) {
    %c0_i32 = arith.constant 0 : i32
    %c0_i32_0 = arith.constant 0 : i32
    %c0_i32_1 = arith.constant 0 : i32
    return %c0_i32, %c0_i32_0 : i32, i32
  }
  func.func @transform_3(%arg0: i32) -> (i32, i32) {
    %c0_i32 = arith.constant 0 : i32
    %c0_i32_0 = arith.constant 0 : i32
    %c0_i32_1 = arith.constant 0 : i32
    return %c0_i32, %c0_i32_0 : i32, i32
  }
  func.func @transform_4(%arg0: i32) -> (i32, i32) {
    %c0_i32 = arith.constant 0 : i32
    %c0_i32_0 = arith.constant 0 : i32
    %c0_i32_1 = arith.constant 0 : i32
    return %c0_i32, %c0_i32_0 : i32, i32
  }
  func.func @transform_5(%arg0: i32) -> (i32, i32) {
    %c0_i32 = arith.constant 0 : i32
    %c0_i32_0 = arith.constant 0 : i32
    %c0_i32_1 = arith.constant 0 : i32
    return %c0_i32, %c0_i32_0 : i32, i32
  }
  func.func @transform_6(%arg0: i32) -> (i32, i32) {
    %c0_i32 = arith.constant 0 : i32
    %c0_i32_0 = arith.constant 0 : i32
    %c0_i32_1 = arith.constant 0 : i32
    return %c0_i32, %c0_i32_0 : i32, i32
  }
  func.func @transform_7(%arg0: i32) -> (i32, i32) {
    %c0_i32 = arith.constant 0 : i32
    %c0_i32_0 = arith.constant 0 : i32
    return %arg0, %c0_i32 : i32, i32
  }
}

</mosaic_0001>

<llo_original>
// kernel: discriminator_forward.1
$region0: #{discriminator_forward.1}
  #allocation0 [shape = 'u32[]', space=smem, size = 0x4, offset = 0x4, fixed_abs, tag = 'smem constant byte address 0x4 - core index']
  #allocation1 [shape = 'u32[144,128]{1,0:T(1,128)}', space=vmem, size = 0x12000, scoped, tag = 'internal scratch']
  %s0 = inlined_call_operand.hbm [shape: f32[2,32], index: 0, kind: input, shape index: {}]
  %s1 = inlined_call_operand.hbm [shape: bf16[32,128], index: 1, kind: input, shape index: {}]
  %s2 = inlined_call_operand.vmem [shape: f32[1,128], index: 2, kind: input, shape index: {}]
  %s3 = inlined_call_operand.hbm [shape: bf16[128,128], index: 3, kind: input, shape index: {}]
  %s4 = inlined_call_operand.vmem [shape: f32[1,128], index: 4, kind: input, shape index: {}]
  %s5 = inlined_call_operand.hbm [shape: bf16[128,128], index: 5, kind: input, shape index: {}]
  %s6 = inlined_call_operand.vmem [shape: f32[1,128], index: 6, kind: input, shape index: {}]
  %s7 = inlined_call_operand.hbm [shape: f32[2,8], index: 7, kind: output, shape index: {}]
  %s8 = sld [smem:[#allocation0]]
  $region54: #{discriminator_forward.1} parent=0
    _
  %s10 = ssub.s32 1, %s8
  %s11 = scalar_select 0, %s10, %s8
  $region1: #{discriminator_forward.1} parent=0
    #allocation2 [shape = 'u8[1024]{0}', space=vmem, size = 0x400, scoped, tag = 'input window, operand 0, single buffered']
    #allocation3 [shape = 's32[1]{0}', space=sflag, size = 0x4, scoped, tag = 'scoped memory for discriminator_forward.1']
    #allocation4 [shape = 's32[1]{0}', space=sflag, size = 0x4, scoped, tag = 'scoped memory for discriminator_forward.1']
    #allocation5 [shape = 'u8[8192]{0}', space=vmem, size = 0x2000, scoped, tag = 'input window, operand 1, single buffered']
    #allocation6 [shape = 's32[1]{0}', space=sflag, size = 0x4, scoped, tag = 'scoped memory for discriminator_forward.1']
    #allocation7 [shape = 'u8[32768]{0}', space=vmem, size = 0x8000, scoped, tag = 'input window, operand 3, single buffered']
    #allocation8 [shape = 'u8[32768]{0}', space=vmem, size = 0x8000, scoped, tag = 'input window, operand 5, single buffered']
    #allocation9 [shape = 's32[1]{0}', space=sflag, size = 0x4, scoped, tag = 'scoped memory for discriminator_forward.1']
    #allocation10 [shape = 'u8[1024]{0}', space=vmem, size = 0x400, scoped, tag = 'output window, operand 0, single buffered']
    %12 = vsyncpa [#allocation3], 0
    %13 = vsyncpa [#allocation6], 0
    %14 = vsyncpa [#allocation9], 0
    %15 = vsyncpa [#allocation4], 0
    // Predicated region
    $region2: #{discriminator_forward.1} parent=1 // pred_check
      _
    $region3: #{discriminator_forward.1} parent=1 // pred_check_branch
      %17 = sbr.rel (0) target = $region5
    $region4: #{discriminator_forward.1} parent=1 // pred_region
      %s19 = ssub.s32 32, 32
      %20 = vsyncadd [#allocation3], %s19
      %s22 = sshll.u32 [#allocation2], 4
      %s23 = int_to_ptr.vmem [resolvable:$true] %s22
      %25 = dma.hbm_to_vmem [thread:$0]  %s0, 32, %s23, [#allocation3]
    $region5: #{discriminator_forward.1} parent=1 // pred_fallthru
      _
    // Predicated region
    $region6: #{discriminator_forward.1} parent=1 // pred_check
      _
    $region7: #{discriminator_forward.1} parent=1 // pred_check_branch
      %27 = sbr.rel (0) target = $region9
    $region8: #{discriminator_forward.1} parent=1 // pred_region
      %s29 = ssub.s32 256, 256
      %30 = vsyncadd [#allocation6], %s29
      %s31 = sshll.u32 [#allocation5], 4
      %s32 = int_to_ptr.vmem [resolvable:$true] %s31
      %37 = dma.hbm_to_vmem [thread:$0]  %s1, 256, %s32, [#allocation6], 64, 64, 4
    $region9: #{discriminator_forward.1} parent=1 // pred_fallthru
      _
    // Predicated region
    $region10: #{discriminator_forward.1} parent=1 // pred_check
      _
    $region11: #{discriminator_forward.1} parent=1 // pred_check_branch
      %39 = sbr.rel (0) target = $region13
    $region12: #{discriminator_forward.1} parent=1 // pred_region
      _
    $region13: #{discriminator_forward.1} parent=1 // pred_fallthru
      _
    // Predicated region
    $region14: #{discriminator_forward.1} parent=1 // pred_check
      _
    $region15: #{discriminator_forward.1} parent=1 // pred_check_branch
      %41 = sbr.rel (0) target = $region17
    $region16: #{discriminator_forward.1} parent=1 // pred_region
      %s43 = ssub.s32 1024, 1024
      %44 = vsyncadd [#allocation6], %s43
      %s45 = sshll.u32 [#allocation7], 4
      %s46 = int_to_ptr.vmem [resolvable:$true] %s45
      %51 = dma.hbm_to_vmem [thread:$0]  %s3, 1024, %s46, [#allocation6], 64, 64, 4
    $region17: #{discriminator_forward.1} parent=1 // pred_fallthru
      _
    // Predicated region
    $region18: #{discriminator_forward.1} parent=1 // pred_check
      _
    $region19: #{discriminator_forward.1} parent=1 // pred_check_branch
      %53 = sbr.rel (0) target = $region21
    $region20: #{discriminator_forward.1} parent=1 // pred_region
      _
    $region21: #{discriminator_forward.1} parent=1 // pred_fallthru
      _
    // Predicated region
    $region22: #{discriminator_forward.1} parent=1 // pred_check
      _
    $region23: #{discriminator_forward.1} parent=1 // pred_check_branch
      %55 = sbr.rel (0) target = $region25
    $region24: #{discriminator_forward.1} parent=1 // pred_region
      %s57 = ssub.s32 1024, 1024
      %58 = vsyncadd [#allocation9], %s57
      %s59 = sshll.u32 [#allocation8], 4
      %s60 = int_to_ptr.vmem [resolvable:$true] %s59
      %65 = dma.hbm_to_vmem [thread:$0]  %s5, 1024, %s60, [#allocation9], 64, 64, 4
    $region25: #{discriminator_forward.1} parent=1 // pred_fallthru
      _
    // Predicated region
    $region26: #{discriminator_forward.1} parent=1 // pred_check
      _
    $region27: #{discriminator_forward.1} parent=1 // pred_check_branch
      %67 = sbr.rel (0) target = $region29
    $region28: #{discriminator_forward.1} parent=1 // pred_region
      _
    $region29: #{discriminator_forward.1} parent=1 // pred_fallthru
      _
    // Predicated region
    $region30: #{discriminator_forward.1} parent=1 // pred_check
      _
    $region31: #{discriminator_forward.1} parent=1 // pred_check_branch
      %69 = sbr.rel (0) target = $region33
    $region32: #{discriminator_forward.1} parent=1 // pred_region
      %70 = dma.done [#allocation3], 32
    $region33: #{discriminator_forward.1} parent=1 // pred_fallthru
      _
    // Predicated region
    $region34: #{discriminator_forward.1} parent=1 // pred_check
      _
    $region35: #{discriminator_forward.1} parent=1 // pred_check_branch
      %72 = sbr.rel (0) target = $region37
    $region36: #{discriminator_forward.1} parent=1 // pred_region
      %73 = dma.done [#allocation6], 256
    $region37: #{discriminator_forward.1} parent=1 // pred_fallthru
      _
    // Predicated region
    $region38: #{discriminator_forward.1} parent=1 // pred_check
      _
    $region39: #{discriminator_forward.1} parent=1 // pred_check_branch
      %75 = sbr.rel (0) target = $region41
    $region40: #{discriminator_forward.1} parent=1 // pred_region
      %76 = dma.done [#allocation6], 1024
    $region41: #{discriminator_forward.1} parent=1 // pred_fallthru
      _
    // Predicated region
    $region42: #{discriminator_forward.1} parent=1 // pred_check
      _
    $region43: #{discriminator_forward.1} parent=1 // pred_check_branch
      %78 = sbr.rel (0) target = $region45
    $region44: #{discriminator_forward.1} parent=1 // pred_region
      %79 = dma.done [#allocation9], 1024
    $region45: #{discriminator_forward.1} parent=1 // pred_fallthru
      _
    %v81 = vld [vmem:[#allocation2] sm:$0x3]
    %v82 = vpack.c.bf16 %v81, %v81
    %v83 = vld [vmem:[#allocation5] sm:$0xf]
    %v84 = vld [vmem:[#allocation5 + $0x4] sm:$0xf]
    %v85 = vld [vmem:[#allocation5 + $0x8] sm:$0xf]
    %v86 = vld [vmem:[#allocation5 + $0xc] sm:$0xf]
    %v87 = vld [vmem:[%s2] sm:$0x1]
    %v89 = vlaneseq
    %v90 = vshrl.u32 %v89, 7
    %v91 = vsub.s32 0, %v90
    %v92 = vrot.slane %v87, %v91
    %v98 = vunpack.c.l.b16 %v83
    %v99 = vunpack.c.l.b16 %v84
    %v100 = vunpack.c.l.b16 %v85
    %v101 = vunpack.c.l.b16 %v86
    %v102 = vpack.c.b16 %v99, %v98
    %v103 = vpack.c.b16 %v101, %v100
    %vm106 = vcmask 261120
    %v108 = vsel %vm106, %v82, 0
    %110 = vmatprep.subr.bf16.mxu0 0
    %111 = vmatpush1.bf16.msra.mxu0 %v102
    %112 = vmatprep.subr.bf16.mxu0 0
    %113 = vmatpush1.bf16.msra.mxu0 %v103
    %114 = vmatprep.subr.bf16.mxu0 0
    %115 = vmatpush1.bf16.msra.mxu0 0
    %116 = vmatprep.subr.bf16.mxu0 0
    %117 = vmatpush1.bf16.msra.mxu0 0
    %118 = vmatprep.subr.bf16.mxu0 0
    %119 = vmatpush1.bf16.msra.mxu0 0
    %120 = vmatprep.subr.bf16.mxu0 0
    %121 = vmatpush1.bf16.msra.mxu0 0
    %122 = vmatprep.subr.bf16.mxu0 0
    %123 = vmatpush1.bf16.msra.mxu0 0
    %124 = vmatprep.subr.bf16.mxu0 0
    %125 = vmatpush1.bf16.msra.mxu0 0
    %126 = vmatprep.subr.bf16.mxu0 0
    %127 = vmatpush1.bf16.msra.mxu0 0
    %128 = vmatprep.subr.bf16.mxu0 0
    %129 = vmatpush1.bf16.msra.mxu0 0
    %130 = vmatprep.subr.bf16.mxu0 0
    %131 = vmatpush1.bf16.msra.mxu0 0
    %132 = vmatprep.subr.bf16.mxu0 0
    %133 = vmatpush1.bf16.msra.mxu0 0
    %134 = vmatprep.subr.bf16.mxu0 0
    %135 = vmatpush1.bf16.msra.mxu0 0
    %136 = vmatprep.subr.bf16.mxu0 0
    %137 = vmatpush1.bf16.msra.mxu0 0
    %138 = vmatprep.subr.bf16.mxu0 0
    %139 = vmatpush1.bf16.msra.mxu0 0
    %140 = vmatprep.subr.bf16.mxu0 0
    %141 = vmatpush1.bf16.msra.mxu0 0
    %142 = vmatprep.mubr.bf16.mxu0 0
    %143 = vmatmul.mubr.bf16.gmra.mrb[0].mxu0 %v108
    %v144 = vpop.f32.mrb[0].mxu0
    %v145 = vadd.f32 %v92, %v144
    %v146 = vpop.f32.mrb[0].mxu0
    %v147 = vpop.f32.mrb[0].mxu0
    %v148 = vpop.f32.mrb[0].mxu0
    %149 = vdwg.mxu0
    %vm150 = vcmp.gt.f32.partialorder %v145, 0.0
    %v151 = vmul.f32 %v145, 0.2
    %v152 = vsel %vm150, %v145, %v151
    %v153 = vpack.c.bf16 %v152, %v152
    %v154 = vld [vmem:[#allocation7] sm:$0xf]
    %v155 = vld [vmem:[#allocation7 + $0x4] sm:$0xf]
    %v156 = vld [vmem:[#allocation7 + $0x8] sm:$0xf]
    %v157 = vld [vmem:[#allocation7 + $0xc] sm:$0xf]
    %v158 = vld [vmem:[#allocation7 + $0x10] sm:$0xf]
    %v159 = vld [vmem:[#allocation7 + $0x14] sm:$0xf]
    %v160 = vld [vmem:[#allocation7 + $0x18] sm:$0xf]
    %v161 = vld [vmem:[#allocation7 + $0x1c] sm:$0xf]
    %v162 = vld [vmem:[#allocation7 + $0x20] sm:$0xf]
    %v163 = vld [vmem:[#allocation7 + $0x24] sm:$0xf]
    %v164 = vld [vmem:[#allocation7 + $0x28] sm:$0xf]
    %v165 = vld [vmem:[#allocation7 + $0x2c] sm:$0xf]
    %v166 = vld [vmem:[#allocation7 + $0x30] sm:$0xf]
    %v167 = vld [vmem:[#allocation7 + $0x34] sm:$0xf]
    %v168 = vld [vmem:[#allocation7 + $0x38] sm:$0xf]
    %v169 = vld [vmem:[#allocation7 + $0x3c] sm:$0xf]
    %v170 = vld [vmem:[%s4] sm:$0x1]
    %v172 = vlaneseq
    %v173 = vshrl.u32 %v172, 7
    %v174 = vsub.s32 0, %v173
    %v175 = vrot.slane %v170, %v174
    %v193 = vunpack.c.l.b16 %v154
    %v194 = vunpack.c.l.b16 %v155
    %v195 = vunpack.c.l.b16 %v156
    %v196 = vunpack.c.l.b16 %v157
    %v197 = vunpack.c.l.b16 %v158
    %v198 = vunpack.c.l.b16 %v159
    %v199 = vunpack.c.l.b16 %v160
    %v200 = vunpack.c.l.b16 %v161
    %v201 = vunpack.c.l.b16 %v162
    %v202 = vunpack.c.l.b16 %v163
    %v203 = vunpack.c.l.b16 %v164
    %v204 = vunpack.c.l.b16 %v165
    %v205 = vunpack.c.l.b16 %v166
    %v206 = vunpack.c.l.b16 %v167
    %v207 = vunpack.c.l.b16 %v168
    %v208 = vunpack.c.l.b16 %v169
    %v209 = vpack.c.b16 %v194, %v193
    %v210 = vpack.c.b16 %v196, %v195
    %v211 = vpack.c.b16 %v198, %v197
    %v212 = vpack.c.b16 %v200, %v199
    %v213 = vpack.c.b16 %v202, %v201
    %v214 = vpack.c.b16 %v204, %v203
    %v215 = vpack.c.b16 %v206, %v205
    %v216 = vpack.c.b16 %v208, %v207
    %225 = vmatprep.subr.bf16.mxu0 0
    %226 = vmatpush1.bf16.msra.mxu0 %v209
    %227 = vmatprep.subr.bf16.mxu0 0
    %228 = vmatpush1.bf16.msra.mxu0 %v210
    %229 = vmatprep.subr.bf16.mxu0 0
    %230 = vmatpush1.bf16.msra.mxu0 %v211
    %231 = vmatprep.subr.bf16.mxu0 0
    %232 = vmatpush1.bf16.msra.mxu0 %v212
    %233 = vmatprep.subr.bf16.mxu0 0
    %234 = vmatpush1.bf16.msra.mxu0 %v213
    %235 = vmatprep.subr.bf16.mxu0 0
    %236 = vmatpush1.bf16.msra.mxu0 %v214
    %237 = vmatprep.subr.bf16.mxu0 0
    %238 = vmatpush1.bf16.msra.mxu0 %v215
    %239 = vmatprep.subr.bf16.mxu0 0
    %240 = vmatpush1.bf16.msra.mxu0 %v216
    %241 = vmatprep.subr.bf16.mxu0 0
    %242 = vmatpush1.bf16.msra.mxu0 0
    %243 = vmatprep.subr.bf16.mxu0 0
    %244 = vmatpush1.bf16.msra.mxu0 0
    %245 = vmatprep.subr.bf16.mxu0 0
    %246 = vmatpush1.bf16.msra.mxu0 0
    %247 = vmatprep.subr.bf16.mxu0 0
    %248 = vmatpush1.bf16.msra.mxu0 0
    %249 = vmatprep.subr.bf16.mxu0 0
    %250 = vmatpush1.bf16.msra.mxu0 0
    %251 = vmatprep.subr.bf16.mxu0 0
    %252 = vmatpush1.bf16.msra.mxu0 0
    %253 = vmatprep.subr.bf16.mxu0 0
    %254 = vmatpush1.bf16.msra.mxu0 0
    %255 = vmatprep.subr.bf16.mxu0 0
    %256 = vmatpush1.bf16.msra.mxu0 0
    %257 = vmatprep.mubr.bf16.mxu0 0
    %258 = vmatmul.mubr.bf16.gmra.mrb[0].mxu0 %v153
    %v259 = vpop.f32.mrb[0].mxu0
    %v260 = vadd.f32 %v175, %v259
    %v261 = vpop.f32.mrb[0].mxu0
    %v262 = vpop.f32.mrb[0].mxu0
    %v263 = vpop.f32.mrb[0].mxu0
    %264 = vdwg.mxu0
    %vm265 = vcmp.gt.f32.partialorder %v260, 0.0
    %v266 = vmul.f32 %v260, 0.2
    %v267 = vsel %vm265, %v260, %v266
    %v268 = vpack.c.bf16 %v267, %v267
    %v269 = vld [vmem:[#allocation8] sm:$0xf]
    %v270 = vld [vmem:[#allocation8 + $0x4] sm:$0xf]
    %v271 = vld [vmem:[#allocation8 + $0x8] sm:$0xf]
    %v272 = vld [vmem:[#allocation8 + $0xc] sm:$0xf]
    %v273 = vld [vmem:[#allocation8 + $0x10] sm:$0xf]
    %v274 = vld [vmem:[#allocation8 + $0x14] sm:$0xf]
    %v275 = vld [vmem:[#allocation8 + $0x18] sm:$0xf]
    %v276 = vld [vmem:[#allocation8 + $0x1c] sm:$0xf]
    %v277 = vld [vmem:[#allocation8 + $0x20] sm:$0xf]
    %v278 = vld [vmem:[#allocation8 + $0x24] sm:$0xf]
    %v279 = vld [vmem:[#allocation8 + $0x28] sm:$0xf]
    %v280 = vld [vmem:[#allocation8 + $0x2c] sm:$0xf]
    %v281 = vld [vmem:[#allocation8 + $0x30] sm:$0xf]
    %v282 = vld [vmem:[#allocation8 + $0x34] sm:$0xf]
    %v283 = vld [vmem:[#allocation8 + $0x38] sm:$0xf]
    %v284 = vld [vmem:[#allocation8 + $0x3c] sm:$0xf]
    %v285 = vld [vmem:[%s6] sm:$0x1]
    %v287 = vlaneseq
    %v288 = vshrl.u32 %v287, 7
    %v289 = vsub.s32 0, %v288
    %v290 = vrot.slane %v285, %v289
    %v308 = vunpack.c.l.b16 %v269
    %v309 = vunpack.c.l.b16 %v270
    %v310 = vunpack.c.l.b16 %v271
    %v311 = vunpack.c.l.b16 %v272
    %v312 = vunpack.c.l.b16 %v273
    %v313 = vunpack.c.l.b16 %v274
    %v314 = vunpack.c.l.b16 %v275
    %v315 = vunpack.c.l.b16 %v276
    %v316 = vunpack.c.l.b16 %v277
    %v317 = vunpack.c.l.b16 %v278
    %v318 = vunpack.c.l.b16 %v279
    %v319 = vunpack.c.l.b16 %v280
    %v320 = vunpack.c.l.b16 %v281
    %v321 = vunpack.c.l.b16 %v282
    %v322 = vunpack.c.l.b16 %v283
    %v323 = vunpack.c.l.b16 %v284
    %v324 = vpack.c.b16 %v309, %v308
    %v325 = vpack.c.b16 %v311, %v310
    %v326 = vpack.c.b16 %v313, %v312
    %v327 = vpack.c.b16 %v315, %v314
    %v328 = vpack.c.b16 %v317, %v316
    %v329 = vpack.c.b16 %v319, %v318
    %v330 = vpack.c.b16 %v321, %v320
    %v331 = vpack.c.b16 %v323, %v322
    %340 = vmatprep.subr.bf16.mxu0 0
    %341 = vmatpush1.bf16.msra.mxu0 %v324
    %342 = vmatprep.subr.bf16.mxu0 0
    %343 = vmatpush1.bf16.msra.mxu0 %v325
    %344 = vmatprep.subr.bf16.mxu0 0
    %345 = vmatpush1.bf16.msra.mxu0 %v326
    %346 = vmatprep.subr.bf16.mxu0 0
    %347 = vmatpush1.bf16.msra.mxu0 %v327
    %348 = vmatprep.subr.bf16.mxu0 0
    %349 = vmatpush1.bf16.msra.mxu0 %v328
    %350 = vmatprep.subr.bf16.mxu0 0
    %351 = vmatpush1.bf16.msra.mxu0 %v329
    %352 = vmatprep.subr.bf16.mxu0 0
    %353 = vmatpush1.bf16.msra.mxu0 %v330
    %354 = vmatprep.subr.bf16.mxu0 0
    %355 = vmatpush1.bf16.msra.mxu0 %v331
    %356 = vmatprep.subr.bf16.mxu0 0
    %357 = vmatpush1.bf16.msra.mxu0 0
    %358 = vmatprep.subr.bf16.mxu0 0
    %359 = vmatpush1.bf16.msra.mxu0 0
    %360 = vmatprep.subr.bf16.mxu0 0
    %361 = vmatpush1.bf16.msra.mxu0 0
    %362 = vmatprep.subr.bf16.mxu0 0
    %363 = vmatpush1.bf16.msra.mxu0 0
    %364 = vmatprep.subr.bf16.mxu0 0
    %365 = vmatpush1.bf16.msra.mxu0 0
    %366 = vmatprep.subr.bf16.mxu0 0
    %367 = vmatpush1.bf16.msra.mxu0 0
    %368 = vmatprep.subr.bf16.mxu0 0
    %369 = vmatpush1.bf16.msra.mxu0 0
    %370 = vmatprep.subr.bf16.mxu0 0
    %371 = vmatpush1.bf16.msra.mxu0 0
    %372 = vmatprep.mubr.bf16.mxu0 0
    %373 = vmatmul.mubr.bf16.gmra.mrb[0].mxu0 %v268
    %v374 = vpop.f32.mrb[0].mxu0
    %v375 = vadd.f32 %v290, %v374
    %v376 = vpop.f32.mrb[0].mxu0
    %v377 = vpop.f32.mrb[0].mxu0
    %v378 = vpop.f32.mrb[0].mxu0
    %379 = vdwg.mxu0
    %vm380 = vcmask 58368
    %381 = vst.msk [vmem:[#allocation10] sm:$0x3] %vm380, %v375
    // Predicated region
    $region46: #{discriminator_forward.1} parent=1 // pred_check
      _
    $region47: #{discriminator_forward.1} parent=1 // pred_check_branch
      %383 = sbr.rel (0) target = $region49
    $region48: #{discriminator_forward.1} parent=1 // pred_region
      %s385 = ssub.s32 32, 32
      %386 = vsyncadd [#allocation4], %s385
      %s388 = sshll.u32 [#allocation10], 4
      %s389 = int_to_ptr.vmem [resolvable:$true] %s388
      %391 = dma.vmem_to_hbm [thread:$0]  %s389, 32, %s7, [#allocation4]
    $region49: #{discriminator_forward.1} parent=1 // pred_fallthru
      _
    // Predicated region
    $region50: #{discriminator_forward.1} parent=1 // pred_check
      _
    $region51: #{discriminator_forward.1} parent=1 // pred_check_branch
      %393 = sbr.rel (0) target = $region53
    $region52: #{discriminator_forward.1} parent=1 // pred_region
      %394 = dma.done [#allocation4], 32
    $region53: #{discriminator_forward.1} parent=1 // pred_fallthru
      _
    %395 = vsyncpa [#allocation3], 1
    %396 = vsyncpa [#allocation6], 1
    %397 = vsyncpa [#allocation9], 1
    %398 = vsyncpa [#allocation4], 1

</llo_original>
